<compile_context>
chip_gen: v5e
topology: v5e:2x2
jax: 0.10.0
libtpu: 0.0.40
codegen_flags: <defaults>
</compile_context>

<pallas_src>
import jax
import jax.numpy as jnp
from jax.experimental import pallas as pl
from jax.experimental.pallas import tpu as pltpu


# -----------------------------------------------------------------------------
# Block-size selection
# -----------------------------------------------------------------------------
def _pick_batch_block(B, T):
    """~128 matmul rows per grid step, but keep >=2 grid steps when B >= 2."""
    target = max(1, -(-128 // max(T, 1)))          # ceil(128 / T)
    bblk = min(B, target)
    if B >= 2:
        bblk = min(bblk, max(1, B // 2))
    while B % bblk:
        bblk -= 1
    return bblk


# -----------------------------------------------------------------------------
# Fused VariancePredictor x3 (duration / pitch / energy) — one pallas_call
# -----------------------------------------------------------------------------
def fused_variance_predictors(x, ps, es, src_lens, params):
    """x: (B,T,H) f32, ps/es: (B,T,1) f32, src_lens: (B,) int32.

    Runs:
      log_d = VP_dur(x);  x2 = x + ps + es;  p = VP_pitch(x2);  e = VP_energy(x2)
    (each VP = Conv1d(k=3,'same') -> ReLU -> LN -> Conv1d(k=3,pad=1) -> ReLU ->
     LN -> Linear(F,1) -> masked_fill(src_mask, 0); dropout = identity, eval).
    Returns (log_d, p, e), each (B, T) f32.
    """
    B, T, H = x.shape
    dp = params["duration_predictor"]
    pp = params["pitch_predictor"]
    ep = params["energy_predictor"]
    K, _, F_ = dp["w1"].shape
    assert K == 3, "VariancePredictor kernel_size must be 3 (conv1d_2 uses padding=1)"
    PAD = (K - 1) // 2

    bblk = _pick_batch_block(B, T)
    G = B // bblk
    N = bblk * T

    # ---- wrapper-side layout plumbing: pad time once, flatten conv taps ----
    xp = jnp.pad(x, ((0, 0), (PAD, PAD), (0, 0)))
    psp = jnp.pad(ps, ((0, 0), (PAD, PAD), (0, 0)))
    esp = jnp.pad(es, ((0, 0), (PAD, PAD), (0, 0)))

    def flat(w):                                   # (K, Cin, Cout) -> (K*Cin, Cout)
        return w.reshape(K * w.shape[1], w.shape[2])

    w1d = flat(dp["w1"]).astype(jnp.bfloat16)                            # (K*H, F)
    w1pe = jnp.concatenate([flat(pp["w1"]), flat(ep["w1"])],
                           axis=1).astype(jnp.bfloat16)                  # (K*H, 2F)
    w2 = jnp.stack([flat(dp["w2"]), flat(pp["w2"]),
                    flat(ep["w2"])]).astype(jnp.bfloat16)                # (3, K*F, F)

    def cat1(key):                                 # (1,F) x3 -> (1,3F) [dur|p|e]
        return jnp.concatenate([dp[key], pp[key], ep[key]], axis=1)

    b1, g1, be1 = cat1("b1"), cat1("g1"), cat1("be1")
    b2, g2, be2 = cat1("b2"), cat1("g2"), cat1("be2")

    # block-structured final Linear: (3, 3F) so one dot yields a (3, N) slab
    wl = jnp.zeros((3, 3 * F_), jnp.float32)
    wl = wl.at[0, 0:F_].set(dp["wl"][0])
    wl = wl.at[1, F_:2 * F_].set(pp["wl"][0])
    wl = wl.at[2, 2 * F_:3 * F_].set(ep["wl"][0])
    bl = jnp.concatenate([dp["bl"], pp["bl"], ep["bl"]], axis=0)         # (3, 1)

    def kernel(lens_ref, x_ref, ps_ref, es_ref,
               w1d_ref, w1pe_ref, b1_ref, g1_ref, be1_ref,
               w2_ref, b2_ref, g2_ref, be2_ref, wl_ref, bl_ref, o_ref):
        xpb = x_ref[...].astype(jnp.float32)                 # (bblk, T+2P, H)
        x2pb = xpb + ps_ref[...] + es_ref[...]               # + pitch/energy "emb"

        def im2col(h3):                  # (bblk, T+2P, C) -> (bblk*T, K*C)
            cols = [h3[:, k:k + T, :] for k in range(K)]
            return jnp.concatenate(cols, axis=-1).reshape(N, K * h3.shape[2])

        def layer_norm(h, g, b):
            mu = jnp.mean(h, axis=-1, keepdims=True)
            var = jnp.mean((h - mu) * (h - mu), axis=-1, keepdims=True)
            return (h - mu) * jax.lax.rsqrt(var + 1e-5) * g + b

        # conv1d_1 + relu_1  (duration branch on x; pitch+energy share x2)
        h1_d = jnp.dot(im2col(xpb).astype(jnp.bfloat16), w1d_ref[...],
                       preferred_element_type=jnp.float32) + b1_ref[0:1, 0:F_]
        h1_d = jnp.maximum(h1_d, 0.0)                                    # (N, F)
        h1_pe = jnp.dot(im2col(x2pb).astype(jnp.bfloat16), w1pe_ref[...],
                        preferred_element_type=jnp.float32) + b1_ref[0:1, F_:3 * F_]
        h1_pe = jnp.maximum(h1_pe, 0.0)                                  # (N, 2F)

        def tail(h1, j):
            sl = slice(j * F_, (j + 1) * F_)
            h = layer_norm(h1, g1_ref[0:1, sl], be1_ref[0:1, sl])        # LN_1
            # conv1d_2 (k=3, padding=1) + relu_2 via in-kernel im2col
            h3 = h.reshape(bblk, T, F_)
            z = jnp.zeros((bblk, PAD, F_), jnp.float32)
            a2 = im2col(jnp.concatenate([z, h3, z], axis=1)).astype(jnp.bfloat16)
            h = jnp.dot(a2, w2_ref[j],
                        preferred_element_type=jnp.float32) + b2_ref[0:1, sl]
            h = jnp.maximum(h, 0.0)
            return layer_norm(h, g2_ref[0:1, sl], be2_ref[0:1, sl])      # LN_2

        h2 = jnp.concatenate([tail(h1_d, 0),
                              tail(h1_pe[:, :F_], 1),
                              tail(h1_pe[:, F_:], 2)], axis=-1)          # (N, 3F)

        # linear_layer for all three predictors at once -> lane-dense (3, N)
        out = jax.lax.dot_general(wl_ref[...], h2, (((1,), (1,)), ((), ())),
                                  preferred_element_type=jnp.float32)
        out = out + bl_ref[...]

        # masked_fill(src_mask, 0): mask rebuilt from prefetched src_lens (SMEM)
        col = jax.lax.broadcasted_iota(jnp.int32, (1, N), 1)
        b_loc = col // T
        t = col - b_loc * T
        i = pl.program_id(0)
        lens_vec = jnp.zeros((1, N), jnp.int32)
        for b in range(bblk):                                  # static, small
            lens_vec = jnp.where(b_loc == b, lens_ref[i * bblk + b], lens_vec)
        o_ref[...] = jnp.where(t < lens_vec, out, 0.0)[None]

    full = lambda a: pl.BlockSpec(a.shape, lambda i, lens, _a=a: (0,) * _a.ndim)
    grid_spec = pltpu.PrefetchScalarGridSpec(
        num_scalar_prefetch=1,
        grid=(G,),
        in_specs=[
            pl.BlockSpec((bblk, T + 2 * PAD, H), lambda i, lens: (i, 0, 0)),
            pl.BlockSpec((bblk, T + 2 * PAD, 1), lambda i, lens: (i, 0, 0)),
            pl.BlockSpec((bblk, T + 2 * PAD, 1), lambda i, lens: (i, 0, 0)),
            full(w1d), full(w1pe), full(b1), full(g1), full(be1),
            full(w2), full(b2), full(g2), full(be2), full(wl), full(bl),
        ],
        out_specs=pl.BlockSpec((1, 3, N), lambda i, lens: (i, 0, 0)),
    )
    out = pl.pallas_call(
        kernel,
        out_shape=jax.ShapeDtypeStruct((G, 3, N), jnp.float32),
        grid_spec=grid_spec,
        compiler_params=pltpu.CompilerParams(
            dimension_semantics=("parallel",),
            # explicit budget: fits v7x's smaller VMEM, fine on v5e/v6e too
            vmem_limit_bytes=32 * 1024 * 1024),
    )(src_lens.astype(jnp.int32), xp, psp, esp,
      w1d, w1pe, b1, g1, be1, w2, b2, g2, be2, wl, bl)

    out = out.reshape(G, 3, bblk, T).transpose(1, 0, 2, 3).reshape(3, B, T)
    return out[0], out[1], out[2]


# -----------------------------------------------------------------------------
# pitch_embed / energy_embed: Conv1d(1 -> A, k=KE, 'same') as one matmul each
# -----------------------------------------------------------------------------
def embed_convs(ps, es, pitch_p, energy_p):
    """ps, es: (B, T, 1) f32.  Returns (p_embs, e_embs), each (B, T, A) f32."""
    B, T, _ = ps.shape
    KE, A = pitch_p["w"].shape
    pad = (KE - 1) // 2

    def im2col(v):                                  # (B, T, 1) -> (B*T, KE)
        vp = jnp.pad(v[..., 0], ((0, 0), (pad, pad)))
        cols = jnp.stack([vp[:, k:k + T] for k in range(KE)], axis=-1)
        return cols.reshape(B * T, KE)

    p_all = jnp.stack([im2col(ps), im2col(es)])                          # (2,BT,KE)
    w_all = jnp.stack([pitch_p["w"], energy_p["w"]]).astype(jnp.bfloat16)  # (2,KE,A)
    b_all = jnp.stack([pitch_p["b"], energy_p["b"]])                     # (2,1,A)

    def kernel(p_ref, w_ref, b_ref, o_ref):
        a = p_ref[0].astype(jnp.bfloat16)                                # (BT, KE)
        o_ref[...] = (jnp.dot(a, w_ref[0], preferred_element_type=jnp.float32)
                      + b_ref[0])[None]
        # dropout: identity (eval)

    out = pl.pallas_call(
        kernel,
        out_shape=jax.ShapeDtypeStruct((2, B * T, A), jnp.float32),
        grid=(2,),
        in_specs=[pl.BlockSpec((1, B * T, KE), lambda j: (j, 0, 0)),
                  pl.BlockSpec((1, KE, A), lambda j: (j, 0, 0)),
                  pl.BlockSpec((1, 1, A), lambda j: (j, 0, 0))],
        out_specs=pl.BlockSpec((1, B * T, A), lambda j: (j, 0, 0)),
        compiler_params=pltpu.CompilerParams(dimension_semantics=("parallel",)),
    )(p_all, w_all, b_all)
    return out[0].reshape(B, T, A), out[1].reshape(B, T, A)


# -----------------------------------------------------------------------------
# Plain-JAX glue (mask / length regulator / adaptor orchestration)
# -----------------------------------------------------------------------------
def get_mask_from_lengths(lengths, max_len):
    ids = jnp.arange(max_len)[None, :]
    return ids >= lengths[:, None]                   # True = padded


def length_regulator(x, duration, max_len):
    """Expand x[b, i] duration[b, i] times along time, pad to max_len."""
    B, T, H = x.shape
    cum = jnp.cumsum(duration, axis=1)               # (B, T)
    mel_len = cum[:, -1].astype(jnp.int32)
    frames = jnp.arange(max_len)
    idx = jax.vmap(lambda c: jnp.searchsorted(c, frames, side="right"))(cum)
    idx = jnp.minimum(idx, T - 1)                    # (B, max_len)
    out = jnp.take_along_axis(x, idx[..., None], axis=1)
    valid = frames[None, :] < mel_len[:, None]
    out = out * valid[..., None].astype(x.dtype)
    return out, mel_len


def variance_adaptor_forward(params, x, ps, es, src_lens, mel_masks, max_len,
                             duration_target):
    # matches VarianceAdaptor.forward with duration_target given
    log_d_pred, p_pred, e_pred = fused_variance_predictors(x, ps, es, src_lens, params)
    x2 = x + ps + es                                  # (B,T,1) broadcast adds
    out, mel_len = length_regulator(x2, duration_target, max_len)
    return out, p_pred, e_pred, log_d_pred, duration_target, mel_len, mel_masks


def jets_forward(params, enc_out, src_lens, mel_lens, max_src_len, max_mel_len,
                 ps, es, ds):
    """Jets.forward starting from the encoder output.

    TODO(synk): Encoder / AlignmentModule / viterbi_decode / average_by_duration
    are undefined in the reference source; enc_out, ds (durations), ps, es
    (phoneme-level pitch/energy) are supplied as inputs instead.
    """
    src_masks = get_mask_from_lengths(src_lens, max_src_len)   # kept for parity
    mel_masks = get_mask_from_lengths(mel_lens, max_mel_len)

    # pitch_embed / energy_embed (computed, but — as in the torch forward —
    # not consumed downstream; ps/es themselves go to the adaptor).
    p_embs, e_embs = embed_convs(ps, es, params["pitch_embed"], params["energy_embed"])

    (output, p_pred, e_pred, log_d_pred,
     d_rounded, mel_len, mel_masks) = variance_adaptor_forward(
        params, enc_out, ps, es, src_lens, mel_masks, max_mel_len, ds)

    # TODO(synk): Decoder, get_random_segments and HiFiGAN generator are
    # undefined in the reference source; pipeline stops here.
    return (output, p_pred, e_pred, log_d_pred, d_rounded, mel_len, mel_masks,
            p_embs, e_embs, src_masks)


# -----------------------------------------------------------------------------
# Parameter init (deterministic, synthetic)
# -----------------------------------------------------------------------------
def init_vp_params(key, in_size, filter_size, kernel):
    ks = jax.random.split(key, 6)
    return dict(
        w1=0.1 * jax.random.normal(ks[0], (kernel, in_size, filter_size), jnp.float32),
        b1=0.01 * jax.random.normal(ks[1], (1, filter_size), jnp.float32),
        g1=jnp.ones((1, filter_size), jnp.float32),
        be1=jnp.zeros((1, filter_size), jnp.float32),
        w2=0.1 * jax.random.normal(ks[2], (kernel, filter_size, filter_size), jnp.float32),
        b2=0.01 * jax.random.normal(ks[3], (1, filter_size), jnp.float32),
        g2=jnp.ones((1, filter_size), jnp.float32),
        be2=jnp.zeros((1, filter_size), jnp.float32),
        wl=0.1 * jax.random.normal(ks[4], (1, filter_size), jnp.float32),
        bl=0.01 * jax.random.normal(ks[5], (1, 1), jnp.float32),
    )


def init_params(key, H, F_, K, A, KE):
    k = jax.random.split(key, 8)
    return dict(
        duration_predictor=init_vp_params(k[0], H, F_, K),
        pitch_predictor=init_vp_params(k[1], H, F_, K),
        energy_predictor=init_vp_params(k[2], H, F_, K),
        pitch_embed=dict(w=0.1 * jax.random.normal(k[3], (KE, A), jnp.float32),
                         b=0.01 * jax.random.normal(k[4], (1, A), jnp.float32)),
        energy_embed=dict(w=0.1 * jax.random.normal(k[5], (KE, A), jnp.float32),
                          b=0.01 * jax.random.normal(k[6], (1, A), jnp.float32)),
    )


# -----------------------------------------------------------------------------
# Plain-JAX reference (mirrors the kernel's bf16-operand / f32-accum matmuls)
# -----------------------------------------------------------------------------
def _bf16_operands(x):
    return x.astype(jnp.bfloat16).astype(jnp.float32)


def _conv1d_same_ref(x, w, b, pad):
    B, T, _ = x.shape
    K = w.shape[0]
    xp = jnp.pad(x, ((0, 0), (pad, pad), (0, 0)))
    out = jnp.zeros((B, T, w.shape[2]), jnp.float32)
    for k in range(K):
        out = out + jnp.einsum("btc,cf->btf",
                               _bf16_operands(xp[:, k:k + T, :]),
                               _bf16_operands(w[k]),
                               precision=jax.lax.Precision.HIGHEST)
    return out + b


def _ln_ref(h, g, b, eps=1e-5):
    mu = h.mean(-1, keepdims=True)
    var = ((h - mu) ** 2).mean(-1, keepdims=True)
    return (h - mu) / jnp.sqrt(var + eps) * g + b


def variance_predictor_ref(x, src_mask, p):
    K = p["w1"].shape[0]
    h = jax.nn.relu(_conv1d_same_ref(x, p["w1"], p["b1"], (K - 1) // 2))
    h = _ln_ref(h, p["g1"], p["be1"])
    h = jax.nn.relu(_conv1d_same_ref(h, p["w2"], p["b2"], 1))
    h = _ln_ref(h, p["g2"], p["be2"])
    out = jnp.einsum("btf,f->bt", h, p["wl"][0],
                     precision=jax.lax.Precision.HIGHEST) + p["bl"][0, 0]
    return jnp.where(src_mask, 0.0, out)


def embed_conv_ref(v, p):
    KE = p["w"].shape[0]
    w3 = p["w"][:, None, :]                            # (KE, 1, A)
    return _conv1d_same_ref(v, w3, p["b"], (KE - 1) // 2)


# -----------------------------------------------------------------------------
if __name__ == "__main__":
    # small synthetic shapes
    B, T, H = 2, 16, 32           # batch, src length, encoder_hidden
    F_, K = 32, 3                 # variance_predictor filter_size, kernel_size
    A, KE = 256, 9                # attention_dim, pitch/energy embed kernel

    key = jax.random.PRNGKey(0)
    k_par, k_x, k_d, k_p, k_e = jax.random.split(key, 5)
    params = init_params(k_par, H, F_, K, A, KE)

    # synthetic "encoder output", phoneme-level pitch/energy, durations
    enc_out = jax.random.normal(k_x, (B, T, H), jnp.float32)
    src_lens = jnp.array([T, T - 4], jnp.int32)
    max_src_len = T
    ids = jnp.arange(T)[None, :]
    dur = jax.random.randint(k_d, (B, T), 1, 4).astype(jnp.int32)
    dur = dur * (ids < src_lens[:, None]).astype(jnp.int32)
    mel_lens = jnp.sum(dur, axis=1).astype(jnp.int32)
    max_mel_len = int(jnp.max(mel_lens))
    ps = jax.random.normal(k_p, (B, T, 1), jnp.float32)
    es = jax.random.normal(k_e, (B, T, 1), jnp.float32)

    outs = jets_forward(params, enc_out, src_lens, mel_lens,
                        max_src_len, max_mel_len, ps, es, dur)
    outs = jax.block_until_ready(outs)
    (output, p_pred, e_pred, log_d_pred, d_rounded, mel_len, mel_masks,
     p_embs, e_embs, src_masks) = outs

    # correctness check of the Pallas kernels vs. plain-JAX reference
    x2 = enc_out + ps + es
    refs = {
        "log_d": variance_predictor_ref(enc_out, src_masks, params["duration_predictor"]),
        "p": variance_predictor_ref(x2, src_masks, params["pitch_predictor"]),
        "e": variance_predictor_ref(x2, src_masks, params["energy_predictor"]),
        "p_embs": embed_conv_ref(ps, params["pitch_embed"]),
        "e_embs": embed_conv_ref(es, params["energy_embed"]),
    }
    got = {"log_d": log_d_pred, "p": p_pred, "e": e_pred,
           "p_embs": p_embs, "e_embs": e_embs}
    for name in refs:
        assert got[name].shape == refs[name].shape, name
        assert jnp.allclose(got[name], refs[name], rtol=5e-3, atol=5e-3), name

    assert output.shape == (B, max_mel_len, H)
    assert mel_masks.shape == (B, max_mel_len)
    print("KERNEL_OK")
</pallas_src>

<mosaic_0001>
module attributes {stable_mosaic.version = 11 : i64} {
  func.func @kernel(%arg0: i32, %arg1: memref<1x32x9xf32, #tpu.memory_space<vmem>>, %arg2: memref<1x9x256xbf16, #tpu.memory_space<vmem>>, %arg3: memref<1x1x256xf32, #tpu.memory_space<vmem>>, %arg4: memref<1x32x256xf32, #tpu.memory_space<vmem>>) attributes {dimension_semantics = [#tpu.dimension_semantics<parallel>], iteration_bounds = array<i64: 2>, scalar_prefetch = 0 : i64, scratch_operands = 0 : i64, tpu.core_type = #tpu.core_type<tc>, window_params = [{transform_indices = @transform_0, window_bounds = array<i64: 1, 32, 9>}, {transform_indices = @transform_1, window_bounds = array<i64: 1, 9, 256>}, {transform_indices = @transform_2, window_bounds = array<i64: 1, 1, 256>}, {transform_indices = @transform_3, window_bounds = array<i64: 1, 32, 256>}]} {
    %c0 = arith.constant 0 : index
    %c0_0 = arith.constant 0 : index
    %c0_1 = arith.constant 0 : index
    %0 = vector.load %arg1[%c0, %c0_0, %c0_1] : memref<1x32x9xf32, #tpu.memory_space<vmem>>, vector<1x32x9xf32>
    %1 = vector.shape_cast %0 : vector<1x32x9xf32> to vector<32x9xf32>
    %2 = arith.truncf %1 : vector<32x9xf32> to vector<32x9xbf16>
    %c0_2 = arith.constant 0 : index
    %c0_3 = arith.constant 0 : index
    %c0_4 = arith.constant 0 : index
    %3 = vector.load %arg2[%c0_2, %c0_3, %c0_4] : memref<1x9x256xbf16, #tpu.memory_space<vmem>>, vector<1x9x256xbf16>
    %4 = vector.shape_cast %3 : vector<1x9x256xbf16> to vector<9x256xbf16>
    %cst = arith.constant dense<0.000000e+00> : vector<32x256xf32>
    %5 = tpu.matmul %2, %4, %cst {dimension_numbers = #tpu.dot_dimension_numbers<[1], [0], [0], [1], [0, 0, 1, 1], [], []>} : vector<32x9xbf16>, vector<9x256xbf16>, vector<32x256xf32> -> vector<32x256xf32>
    %c0_5 = arith.constant 0 : index
    %c0_6 = arith.constant 0 : index
    %c0_7 = arith.constant 0 : index
    %6 = vector.load %arg3[%c0_5, %c0_6, %c0_7] : memref<1x1x256xf32, #tpu.memory_space<vmem>>, vector<1x1x256xf32>
    %7 = vector.shape_cast %6 : vector<1x1x256xf32> to vector<1x256xf32>
    %8 = vector.broadcast %7 : vector<1x256xf32> to vector<32x256xf32>
    %9 = arith.addf %5, %8 : vector<32x256xf32>
    %10 = vector.shape_cast %9 : vector<32x256xf32> to vector<1x32x256xf32>
    %c0_8 = arith.constant 0 : index
    %c0_9 = arith.constant 0 : index
    %c0_10 = arith.constant 0 : index
    %11 = vector.load %arg4[%c0_8, %c0_9, %c0_10] : memref<1x32x256xf32, #tpu.memory_space<vmem>>, vector<1x32x256xf32>
    tpu.vector_store %arg4[%c0_8, %c0_9, %c0_10], %10 {strides = array<i32>} : memref<1x32x256xf32, #tpu.memory_space<vmem>>, vector<1x32x256xf32>,
    return
  }
  func.func @transform_0(%arg0: i32) -> (i32, i32, i32) {
    %c0_i32 = arith.constant 0 : i32
    %c0_i32_0 = arith.constant 0 : i32
    %c0_i32_1 = arith.constant 0 : i32
    return %arg0, %c0_i32, %c0_i32_0 : i32, i32, i32
  }
  func.func @transform_1(%arg0: i32) -> (i32, i32, i32) {
    %c0_i32 = arith.constant 0 : i32
    %c0_i32_0 = arith.constant 0 : i32
    %c0_i32_1 = arith.constant 0 : i32
    return %arg0, %c0_i32, %c0_i32_0 : i32, i32, i32
  }
  func.func @transform_2(%arg0: i32) -> (i32, i32, i32) {
    %c0_i32 = arith.constant 0 : i32
    %c0_i32_0 = arith.constant 0 : i32
    %c0_i32_1 = arith.constant 0 : i32
    return %arg0, %c0_i32, %c0_i32_0 : i32, i32, i32
  }
  func.func @transform_3(%arg0: i32) -> (i32, i32, i32) {
    %c0_i32 = arith.constant 0 : i32
    %c0_i32_0 = arith.constant 0 : i32
    %c0_i32_1 = arith.constant 0 : i32
    return %arg0, %c0_i32, %c0_i32_0 : i32, i32, i32
  }
}

</mosaic_0001>

<llo_original>
// kernel: tpu_custom_call.1
$region0: #{tpu_custom_call.1}
  #allocation0 [shape = 'u32[]', space=smem, size = 0x4, offset = 0x4, fixed_abs, tag = 'smem constant byte address 0x4 - core index']
  #allocation1 [shape = 'u32[72,128]{1,0:T(1,128)}', space=vmem, size = 0x9000, scoped, tag = 'internal scratch']
  %s0 = inlined_call_operand.vmem [shape: f32[2,32,9], index: 0, kind: input, shape index: {}]
  %s1 = inlined_call_operand.vmem [shape: bf16[2,9,256], index: 1, kind: input, shape index: {}]
  %s2 = inlined_call_operand.vmem [shape: f32[2,1,256], index: 2, kind: input, shape index: {}]
  %s3 = inlined_call_operand.hbm [shape: f32[2,32,256], index: 3, kind: output, shape index: {}]
  %s4 = sld [smem:[#allocation0]]
  $region45: #{tpu_custom_call.1} parent=0
    _
  %s6 = ssub.s32 1, %s4
  %s7 = scalar_select 0, %s6, %s4
  $region1: #{tpu_custom_call.1} parent=0
    #allocation2 [shape = 'u8[65536]{0}', space=vmem, size = 0x10000, scoped, tag = 'output window, operand 0']
    #allocation3 [shape = 's32[2]{0}', space=sflag, size = 0x8, scoped, tag = 'scoped memory for tpu_custom_call.1']
    %8 = vsyncpa [#allocation3], 0
    %s9 = scalar_lea.sflag [#allocation3], 1
    %10 = vsyncpa %s9, 0
    loop: start=0, step=1, limit=4
    $region2: #{tpu_custom_call.1} parent=1 // loop_pre_header
      _
    $region3: #{tpu_custom_call.1} parent=1 // loop_header
      %s12 = sphi 0, %s16
      %p13 = scmp.ge.s32.totalorder %s12, 4
      %s22 = sphi 0, %s24
      %s25 = sphi 0, %s22
      %s26 = sphi 0, %s25
      %s42 = sphi 0, %s26
      %s48 = sphi 0, %s50
      %s51 = sphi 0, %s48
      %s52 = sphi 0, %s51
      %s68 = sphi 0, %s52
      %s74 = sphi 0, %s76
      %s77 = sphi 0, %s74
      %s78 = sphi 0, %s77
      %s94 = sphi 0, %s78
      %s100 = sphi 0, %s102
      %s103 = sphi 0, %s100
      %s104 = sphi 0, %s103
      %s120 = sphi 0, %s104
    $region4: #{tpu_custom_call.1} parent=1 // loop_header_branch
      %15 = sbr.rel (%p13) target = $region8
    $region5: #{tpu_custom_call.1} parent=1 // loop_body
      %s17 = ssub.s32 %s12, 1
      %s18 = ssub.s32 %s12, 2
      %s19 = sadd.s32 %s12, 1
      %s20 = ssub.s32 %s12, %s19
      %p21 = scmp.eq.s32.totalorder %s20, 0
      %s23 = sadd.s32 %s22, 1
      %s24 = scalar_select %p21, %s22, %s23
      %p27 = pneg %p21
      %p28 = scmp.eq.s32.totalorder %s12, 1
      %p29 = por %p27, %p28
      %p30 = scmp.ne.s32.totalorder %s22, %s25
      %p31 = scmp.eq.s32.totalorder %s12, 0
      %p32 = por %p30, %p31
      %p33 = scmp.ne.s32.totalorder %s22, %s25
      %p34 = scmp.eq.s32.totalorder %s17, 1
      %p35 = por %p33, %p34
      %p36 = scmp.ne.s32.totalorder %s25, %s26
      %p37 = scmp.eq.s32.totalorder %s17, 0
      %p38 = por %p36, %p37
      %p39 = scmp.ne.s32.totalorder %s25, %s26
      %p40 = scmp.eq.s32.totalorder %s18, 1
      %p41 = por %p39, %p40
      %p43 = scmp.ne.s32.totalorder %s26, %s42
      %p44 = scmp.eq.s32.totalorder %s18, 0
      %p45 = por %p43, %p44
      %s46 = ssub.s32 %s12, %s19
      %p47 = scmp.eq.s32.totalorder %s46, 0
      %s49 = sadd.s32 %s48, 1
      %s50 = scalar_select %p47, %s48, %s49
      %p53 = pneg %p47
      %p54 = scmp.eq.s32.totalorder %s12, 1
      %p55 = por %p53, %p54
      %p56 = scmp.ne.s32.totalorder %s48, %s51
      %p57 = scmp.eq.s32.totalorder %s12, 0
      %p58 = por %p56, %p57
      %p59 = scmp.ne.s32.totalorder %s48, %s51
      %p60 = scmp.eq.s32.totalorder %s17, 1
      %p61 = por %p59, %p60
      %p62 = scmp.ne.s32.totalorder %s51, %s52
      %p63 = scmp.eq.s32.totalorder %s17, 0
      %p64 = por %p62, %p63
      %p65 = scmp.ne.s32.totalorder %s51, %s52
      %p66 = scmp.eq.s32.totalorder %s18, 1
      %p67 = por %p65, %p66
      %p69 = scmp.ne.s32.totalorder %s52, %s68
      %p70 = scmp.eq.s32.totalorder %s18, 0
      %p71 = por %p69, %p70
      %s72 = ssub.s32 %s12, %s19
      %p73 = scmp.eq.s32.totalorder %s72, 0
      %s75 = sadd.s32 %s74, 1
      %s76 = scalar_select %p73, %s74, %s75
      %p79 = pneg %p73
      %p80 = scmp.eq.s32.totalorder %s12, 1
      %p81 = por %p79, %p80
      %p82 = scmp.ne.s32.totalorder %s74, %s77
      %p83 = scmp.eq.s32.totalorder %s12, 0
      %p84 = por %p82, %p83
      %p85 = scmp.ne.s32.totalorder %s74, %s77
      %p86 = scmp.eq.s32.totalorder %s17, 1
      %p87 = por %p85, %p86
      %p88 = scmp.ne.s32.totalorder %s77, %s78
      %p89 = scmp.eq.s32.totalorder %s17, 0
      %p90 = por %p88, %p89
      %p91 = scmp.ne.s32.totalorder %s77, %s78
      %p92 = scmp.eq.s32.totalorder %s18, 1
      %p93 = por %p91, %p92
      %p95 = scmp.ne.s32.totalorder %s78, %s94
      %p96 = scmp.eq.s32.totalorder %s18, 0
      %p97 = por %p95, %p96
      %s98 = ssub.s32 %s12, %s19
      %p99 = scmp.eq.s32.totalorder %s98, 0
      %s101 = sadd.s32 %s100, 1
      %s102 = scalar_select %p99, %s100, %s101
      %p105 = pneg %p99
      %p106 = scmp.eq.s32.totalorder %s12, 1
      %p107 = por %p105, %p106
      %p108 = scmp.ne.s32.totalorder %s100, %s103
      %p109 = scmp.eq.s32.totalorder %s12, 0
      %p110 = por %p108, %p109
      %p111 = scmp.ne.s32.totalorder %s100, %s103
      %p112 = scmp.eq.s32.totalorder %s17, 1
      %p113 = por %p111, %p112
      %p114 = scmp.ne.s32.totalorder %s103, %s104
      %p115 = scmp.eq.s32.totalorder %s17, 0
      %p116 = por %p114, %p115
      %p117 = scmp.ne.s32.totalorder %s103, %s104
      %p118 = scmp.eq.s32.totalorder %s18, 1
      %p119 = por %p117, %p118
      %p121 = scmp.ne.s32.totalorder %s104, %s120
      %p122 = scmp.eq.s32.totalorder %s18, 0
      %p123 = por %p121, %p122
      %p124 = scmp.le.s32.totalorder 1, %s12
      %p125 = scmp.lt.s32.totalorder %s12, 3
      %p126 = pnand %p124, %p125
      %p127 = pneg %p126
      // Predicated region
      $region9: #{tpu_custom_call.1} parent=5 // pred_check
        _
      $region10: #{tpu_custom_call.1} parent=5 // pred_check_branch
        %129 = sbr.rel (%p126) target = $region12
      $region11: #{tpu_custom_call.1} parent=5 // pred_region
        %s130 = ssub.s32 %s12, 1
      $region12: #{tpu_custom_call.1} parent=5 // pred_fallthru
        _
      %p131 = scmp.lt.s32.totalorder %s12, 2
      // Predicated region
      $region13: #{tpu_custom_call.1} parent=5 // pred_check
        %p132 = pneg %p131
      $region14: #{tpu_custom_call.1} parent=5 // pred_check_branch
        %134 = sbr.rel (%p132) target = $region16
      $region15: #{tpu_custom_call.1} parent=5 // pred_region
        // Predicated region
        $region17: #{tpu_custom_call.1} parent=15 // pred_check
          %p135 = pneg %p32
        $region18: #{tpu_custom_call.1} parent=15 // pred_check_branch
          %137 = sbr.rel (%p135) target = $region20
        $region19: #{tpu_custom_call.1} parent=15 // pred_region
          %p138 = scmp.lt.s32.totalorder %s12, 1
          %s139 = scalar_select %p138, %s12, 1
          %s140 = smul.addr %s139, 4
          %s141 = smul.addr %s140, 8
          %s142 = scalar_lea.vmem %s0, %s141
        $region20: #{tpu_custom_call.1} parent=15 // pred_fallthru
          _
        // Predicated region
        $region21: #{tpu_custom_call.1} parent=15 // pred_check
          %p143 = pneg %p58
        $region22: #{tpu_custom_call.1} parent=15 // pred_check_branch
          %145 = sbr.rel (%p143) target = $region24
        $region23: #{tpu_custom_call.1} parent=15 // pred_region
          %p146 = scmp.lt.s32.totalorder %s12, 1
          %s147 = scalar_select %p146, %s12, 1
          %s148 = smul.addr %s147, 4
          %s149 = smul.addr %s148, 4
          %s150 = scalar_lea.vmem %s1, %s149
        $region24: #{tpu_custom_call.1} parent=15 // pred_fallthru
          _
        // Predicated region
        $region25: #{tpu_custom_call.1} parent=15 // pred_check
          %p151 = pneg %p84
        $region26: #{tpu_custom_call.1} parent=15 // pred_check_branch
          %153 = sbr.rel (%p151) target = $region28
        $region27: #{tpu_custom_call.1} parent=15 // pred_region
          %p154 = scmp.lt.s32.totalorder %s12, 1
          %s155 = scalar_select %p154, %s12, 1
          %s156 = smul.addr %s155, 2
          %s157 = scalar_lea.vmem %s2, %s156
        $region28: #{tpu_custom_call.1} parent=15 // pred_fallthru
          _
      $region16: #{tpu_custom_call.1} parent=5 // pred_fallthru
        _
      %p158 = scmp.le.s32.totalorder 1, %s12
      %p159 = scmp.lt.s32.totalorder %s12, 3
      %p160 = pnand %p158, %p159
      %p161 = pneg %p160
      // Predicated region
      $region29: #{tpu_custom_call.1} parent=5 // pred_check
        _
      $region30: #{tpu_custom_call.1} parent=5 // pred_check_branch
        %163 = sbr.rel (%p160) target = $region32
      $region31: #{tpu_custom_call.1} parent=5 // pred_region
        %s164 = ssub.s32 %s12, 1
        %p165 = scmp.lt.s32.totalorder %s17, 1
        %s166 = scalar_select %p165, %s17, 1
        %s167 = smul.addr %s166, 4
        %s168 = smul.addr %s167, 8
        %s169 = scalar_lea.vmem %s0, %s168
        %p170 = pneg %p38
        %p171 = pneg %p35
        %p172 = scmp.lt.s32.totalorder %s17, 1
        %s173 = scalar_select %p172, %s17, 1
        %s174 = smul.addr %s173, 4
        %s175 = smul.addr %s174, 4
        %s176 = scalar_lea.vmem %s1, %s175
        %p177 = pneg %p64
        %p178 = pneg %p61
        %p179 = scmp.lt.s32.totalorder %s17, 1
        %s180 = scalar_select %p179, %s17, 1
        %s181 = smul.addr %s180, 2
        %s182 = scalar_lea.vmem %s2, %s181
        %p183 = pneg %p90
        %p184 = pneg %p87
        %p185 = pneg %p116
        %p186 = pneg %p113
        %s187 = sand.u32 %s103, 1
        %s188 = scalar_lea.sflag [#allocation3], %s187
        %s189 = sand.u32 %s103, 1
        %s190 = smul.addr %s189, 64
        %s191 = scalar_lea.vmem [#allocation2], %s190
        %p192 = scmp.lt.s32.totalorder %s17, 1
        %s193 = scalar_select %p192, %s17, 1
        %s194 = smul.addr %s193, 4
        %s195 = smul.addr %s194, 8
        %s196 = scalar_lea.vmem %s0, %s195
        %p197 = scmp.lt.s32.totalorder %s17, 1
        %s198 = scalar_select %p197, %s17, 1
        %s199 = smul.addr %s198, 4
        %s200 = smul.addr %s199, 4
        %s201 = scalar_lea.vmem %s1, %s200
        %p202 = scmp.lt.s32.totalorder %s17, 1
        %s203 = scalar_select %p202, %s17, 1
        %s204 = smul.addr %s203, 2
        %s205 = scalar_lea.vmem %s2, %s204
        %v207 = vld [vmem:[%s196] sm:$0xff]
        %v208 = vld [vmem:[%s196 + $0x8] sm:$0xff]
        %v209 = vld [vmem:[%s196 + $0x10] sm:$0xff]
        %v210 = vld [vmem:[%s196 + $0x18] sm:$0xff]
        %v211 = vpack.c.bf16 %v208, %v207
        %v212 = vpack.c.bf16 %v210, %v209
        %v213 = vld [vmem:[%s201] sm:$0xff]
        %v214 = vld [vmem:[%s201 + $0x8] sm:$0x11]
        %v215 = vld [vmem:[%s205] sm:$0x3]
        %v217 = vperm.slane %v215, 0
        %v218 = vperm.slane %v215, 1
        %v223 = vunpack.c.l.b16 %v213
        %v224 = vunpack.c.h.b16 %v213
        %v225 = vunpack.c.l.b16 %v214
        %v226 = vunpack.c.h.b16 %v214
        %v227 = vpack.c.b16 %v225, %v223
        %v228 = vpack.c.b16 %v226, %v224
        %vm229 = vcmask 72704
        %v231 = vsel %vm229, %v211, 0
        %v234 = vsel %vm229, %v212, 0
        %vm236 = vcmask 1043456
        %vm237 = vcmask 1044480
        %v238 = vsel %vm236, 4294967295, 65535
        %v239 = vsel %vm237, %v238, 0
        %v241 = vand.u32 %v227, %v239
        %v244 = vand.u32 %v228, %v239
        %246 = vmatpush.bf16.msra.mxu0 0
        %247 = vmatpush.bf16.msra.mxu0 0
        %248 = vmatpush.bf16.msra.mxu0 0
        %249 = vmatpush.bf16.msra.mxu0 0
        %250 = vmatpush.bf16.msra.mxu0 0
        %251 = vmatpush.bf16.msra.mxu0 0
        %252 = vmatpush.bf16.msra.mxu0 0
        %253 = vmatpush.bf16.msra.mxu0 %v241
        %254 = vmatmul.bf16.gmra.mxu0 %v231
        %v255 = vpop.f32.mrf.mxu0
        %v256 = vadd.f32 %v217, %v255
        %v257 = vpop.f32.mrf.mxu0
        %v258 = vadd.f32 %v217, %v257
        %259 = vmatmul.bf16.gmra.mxu0 %v234
        %v260 = vpop.f32.mrf.mxu0
        %v261 = vadd.f32 %v217, %v260
        %v262 = vpop.f32.mrf.mxu0
        %v263 = vadd.f32 %v217, %v262
        %264 = vdwg.mxu0
        %265 = vmatpush.bf16.msra.mxu0 0
        %266 = vmatpush.bf16.msra.mxu0 0
        %267 = vmatpush.bf16.msra.mxu0 0
        %268 = vmatpush.bf16.msra.mxu0 0
        %269 = vmatpush.bf16.msra.mxu0 0
        %270 = vmatpush.bf16.msra.mxu0 0
        %271 = vmatpush.bf16.msra.mxu0 0
        %272 = vmatpush.bf16.msra.mxu0 %v244
        %273 = vmatmul.bf16.gmra.mxu0 %v231
        %v274 = vpop.f32.mrf.mxu0
        %v275 = vadd.f32 %v218, %v274
        %v276 = vpop.f32.mrf.mxu0
        %v277 = vadd.f32 %v218, %v276
        %278 = vmatmul.bf16.gmra.mxu0 %v234
        %v279 = vpop.f32.mrf.mxu0
        %v280 = vadd.f32 %v218, %v279
        %v281 = vpop.f32.mrf.mxu0
        %v282 = vadd.f32 %v218, %v281
        %283 = vdwg.mxu0
        %284 = vst [vmem:[%s191] sm:$0xff] %v256
        %285 = vst [vmem:[%s191 + $0x8] sm:$0xff] %v275
        %286 = vst [vmem:[%s191 + $0x10] sm:$0xff] %v258
        %287 = vst [vmem:[%s191 + $0x18] sm:$0xff] %v277
        %288 = vst [vmem:[%s191 + $0x20] sm:$0xff] %v261
        %289 = vst [vmem:[%s191 + $0x28] sm:$0xff] %v280
        %290 = vst [vmem:[%s191 + $0x30] sm:$0xff] %v263
        %291 = vst [vmem:[%s191 + $0x38] sm:$0xff] %v282
        %s292 = sand.u32 %s103, 1
        %s293 = scalar_lea.sflag [#allocation3], %s292
        %s294 = sand.u32 %s103, 1
        %s295 = smul.addr %s294, 64
        %s296 = scalar_lea.vmem [#allocation2], %s295
        // Predicated region
        $region33: #{tpu_custom_call.1} parent=31 // pred_check
          %p297 = pneg %p113
        $region34: #{tpu_custom_call.1} parent=31 // pred_check_branch
          %299 = sbr.rel (%p297) target = $region36
        $region35: #{tpu_custom_call.1} parent=31 // pred_region
          %301 = vsyncadd %s293, 0
          %s302 = smul.addr %s17, 8
          %s303 = smul.addr %s302, 8
          %s304 = scalar_lea.hbm %s3, %s303
          %s305 = sshll.u32 %s296, 4
          %s306 = int_to_ptr.vmem [resolvable:$true] %s305
          %s307 = sshll.u32 %s304, 4
          %s308 = int_to_ptr.hbm [resolvable:$true] %s307
          %313 = dma.vmem_to_hbm [thread:$0]  %s306, 1024, %s308, %s293, 256, 256, 16
        $region36: #{tpu_custom_call.1} parent=31 // pred_fallthru
          _
      $region32: #{tpu_custom_call.1} parent=5 // pred_fallthru
        _
      %p314 = scmp.le.s32.totalorder 2, %s12
      // Predicated region
      $region37: #{tpu_custom_call.1} parent=5 // pred_check
        %p315 = pneg %p314
      $region38: #{tpu_custom_call.1} parent=5 // pred_check_branch
        %317 = sbr.rel (%p315) target = $region40
      $region39: #{tpu_custom_call.1} parent=5 // pred_region
        %s318 = ssub.s32 %s12, 2
        // Predicated region
        $region41: #{tpu_custom_call.1} parent=39 // pred_check
          %p319 = pneg %p119
        $region42: #{tpu_custom_call.1} parent=39 // pred_check_branch
          %321 = sbr.rel (%p319) target = $region44
        $region43: #{tpu_custom_call.1} parent=39 // pred_region
          %s322 = sand.u32 %s104, 1
          %s323 = scalar_lea.sflag [#allocation3], %s322
          %s324 = sand.u32 %s104, 1
          %s325 = smul.addr %s324, 64
          %s326 = scalar_lea.vmem [#allocation2], %s325
          %328 = dma.done %s323, 1024
        $region44: #{tpu_custom_call.1} parent=39 // pred_fallthru
          _
      $region40: #{tpu_custom_call.1} parent=5 // pred_fallthru
        _
    $region6: #{tpu_custom_call.1} parent=1 // loop_footer
      %s16 = sadd.s32 1, %s12
    $region7: #{tpu_custom_call.1} parent=1 // loop_footer_branch
      %11 = sbr.rel target = $region3
    $region8: #{tpu_custom_call.1} parent=1 // loop_exit
      _
    %329 = vsyncpa [#allocation3], 1
    %s330 = scalar_lea.sflag [#allocation3], 1
    %331 = vsyncpa %s330, 1

</llo_original>
